<compile_context>
chip_gen: v6e
topology: v6e:2x2x1
jax: 0.10.0
libtpu: 0.0.40
codegen_flags: <defaults>
</compile_context>

<pallas_src>
import functools

import jax
import jax.numpy as jnp
from jax.experimental import pallas as pl
from jax.experimental.pallas import tpu as pltpu


def _luong_concat_kernel(qp_ref, vflat_ref, wv_ref, vw_ref, ctx_ref, attn_ref,
                         *, approx_recip):
    # qp_ref:    (Bt, U)     f32   query @ Wq^T + b_W (precomputed in wrapper)
    # vflat_ref: (Bt*S, H)   compute dtype (bf16/f32), values flattened batch-major
    # wv_ref:    (H, U)      compute dtype, W weight (values half), transposed
    # vw_ref:    (1, U)      f32   V weight row (V bias dropped: softmax-invariant)
    # ctx_ref:   (Bt, H)     f32   context output (lane-dense)
    # attn_ref:  (Bt, S)     f32   attention weights (lane-dense)
    Bt, U = qp_ref.shape
    BtS, H = vflat_ref.shape
    S = BtS // Bt

    vflat = vflat_ref[...]                                        # (Bt*S, H)

    # One (Bt*S, H) x (H, U) MXU matmul covers every row of the tile.
    hflat = jnp.dot(vflat, wv_ref[...],
                    preferred_element_type=jnp.float32)           # (Bt*S, U) f32

    # Per-batch query add + tanh.  The f32 reshape is a free reinterpretation
    # when S is a multiple of 8 (sublane-aligned split of the leading dim).
    h = jnp.tanh(hflat.reshape(Bt, S, U) + qp_ref[...][:, None, :])

    # score = h @ V^T as a VPU multiply + lane reduce (no N=1 MXU matmul).
    score = jnp.sum(h * vw_ref[...], axis=-1)                     # (Bt, S) f32

    # Softmax over the sequence axis (last axis -> cheap lane reduce);
    # the divide goes to the EUP via pl.reciprocal.
    m = jnp.max(score, axis=-1, keepdims=True)
    e = jnp.exp(score - m)
    denom = jnp.sum(e, axis=-1, keepdims=True)
    attn = e * pl.reciprocal(denom, approx=approx_recip)          # (Bt, S) f32
    attn_ref[...] = attn

    # context = sum_s attn * values on the VPU + sublane reduce (FLOPs are tiny
    # vs. the W projection, so no MXU round trip).  Accumulate in f32.
    vals = vflat.astype(jnp.float32).reshape(Bt, S, H)            # (Bt, S, H)
    ctx_ref[...] = jnp.sum(attn[:, :, None] * vals, axis=1)       # (Bt, H)


def _device_tiling_params():
    """(vmem budget for tile sizing, scoped vmem limit, minimum grid steps)."""
    try:
        kind = jax.devices()[0].device_kind.lower()
    except Exception:
        kind = ""
    if "v7" in kind:
        # 64 MiB physical VMEM, 2 TensorCores: smaller budget, keep >=2 steps
        # so both cores get work under dimension_semantics=("parallel",).
        return 16 << 20, 48 << 20, 2
    if "v6" in kind or "v5" in kind:
        # 128 MiB VMEM, single TC: grow the tile; a 1-step grid is fine.
        return 48 << 20, 100 << 20, 1
    # Unknown generation: conservative defaults.
    return 16 << 20, 32 << 20, 1


def _choose_batch_tile(B_pad, per_b_bytes, fixed_bytes, budget_bytes, max_tile):
    """Largest multiple-of-8 batch tile dividing B_pad that fits the budget."""
    cap = (budget_bytes - fixed_bytes) // max(per_b_bytes, 1)
    cap = max(8, min(cap, max_tile, B_pad))
    bt = (cap // 8) * 8
    while bt >= 8:
        if B_pad % bt == 0:
            return bt
        bt -= 8
    return 8  # B_pad is always a multiple of 8


def luong_attention_concat(query, values, w_weight, w_bias, v_weight, v_bias,
                           *, compute_dtype=jnp.bfloat16):
    """query: (1, B, H); values: (B, S, H).
    Returns (context_vector (B, H), attention_weights (B, S, 1)), float32."""
    B, S, H = values.shape
    U = w_weight.shape[0]
    compute_dtype = jnp.dtype(compute_dtype)
    itemsize = compute_dtype.itemsize

    q = jnp.squeeze(query, 0).astype(jnp.float32)                  # (B, H)
    # Hoisted query projection: one (B,H)x(H,U) XLA matmul, kept in f32.
    q_proj = q @ w_weight[:, H:].astype(jnp.float32).T + w_bias    # (B, U)
    wv_t = w_weight[:, :H].T.astype(compute_dtype)                 # (H, U)
    vw_row = v_weight.reshape(1, U).astype(jnp.float32)            # (1, U)
    # v_bias intentionally dropped (softmax shift-invariance).

    # Pad B to a multiple of 8 -> sublane-dense 2D tiles, no Bt=1 collapse.
    B_pad = ((B + 7) // 8) * 8
    if B_pad != B:
        values = jnp.pad(values, ((0, B_pad - B), (0, 0), (0, 0)))
        q_proj = jnp.pad(q_proj, ((0, B_pad - B), (0, 0)))
    vflat = values.reshape(B_pad * S, H).astype(compute_dtype)     # (B_pad*S, H)

    budget, vmem_limit, min_steps = _device_tiling_params()
    per_b = (2 * (S * H * itemsize                 # values tile (double-buffered)
                  + U * 4                          # q_proj tile
                  + H * 4 + S * 4)                 # ctx / attn output tiles
             + 3 * S * U * 4                       # h / tanh / exp f32 intermediates
             + S * H * 4)                          # f32 values copy for the context
    fixed = 2 * (H * U * itemsize + U * 4)         # shared weights (double-buffered)
    max_tile = B_pad if min_steps <= 1 else max(8, B_pad // min_steps)
    Bt = _choose_batch_tile(B_pad, per_b, fixed, budget, max_tile)
    grid = (B_pad // Bt,)

    kernel = functools.partial(
        _luong_concat_kernel,
        approx_recip=(compute_dtype == jnp.dtype(jnp.bfloat16)))

    ctx_pad, attn_pad = pl.pallas_call(
        kernel,
        out_shape=(
            jax.ShapeDtypeStruct((B_pad, H), jnp.float32),
            jax.ShapeDtypeStruct((B_pad, S), jnp.float32),
        ),
        grid_spec=pltpu.PrefetchScalarGridSpec(
            num_scalar_prefetch=0,
            grid=grid,
            in_specs=[
                pl.BlockSpec((Bt, U), lambda b: (b, 0)),           # q_proj (f32)
                pl.BlockSpec((Bt * S, H), lambda b: (b, 0)),       # values, flat, bf16
                pl.BlockSpec((H, U), lambda b: (0, 0)),            # Wv^T (shared)
                pl.BlockSpec((1, U), lambda b: (0, 0)),            # V row (shared)
            ],
            out_specs=[
                pl.BlockSpec((Bt, H), lambda b: (b, 0)),           # context
                pl.BlockSpec((Bt, S), lambda b: (b, 0)),           # attention weights
            ],
        ),
        compiler_params=pltpu.CompilerParams(
            dimension_semantics=("parallel",),
            vmem_limit_bytes=vmem_limit,
        ),
    )(q_proj, vflat, wv_t, vw_row)

    context = ctx_pad[:B]                                          # (B, H)
    attn = attn_pad[:B, :, None]                                   # (B, S, 1)
    return context, attn


def reference(query, values, w_weight, w_bias, v_weight, v_bias):
    """Pure-JAX mirror of the PyTorch forward, for verification."""
    q = jnp.squeeze(query, 0)                                      # (B, H)
    B, S, H = values.shape
    q = jnp.broadcast_to(q[:, None, :], (B, S, H))                 # repeat over seq
    cat = jnp.concatenate([values, q], axis=2)                     # (B, S, 2H)
    hid = jnp.tanh(cat @ w_weight.T + w_bias)                      # (B, S, U)
    score = hid @ v_weight.T + v_bias                              # (B, S, 1)
    attn = jax.nn.softmax(score, axis=1)
    ctx = jnp.sum(attn * values, axis=1)                           # (B, H)
    return ctx, attn


if __name__ == "__main__":
    B, S, H, U = 2, 8, 32, 16

    key = jax.random.PRNGKey(0)
    k1, k2, k3, k4, k5, k6 = jax.random.split(key, 6)

    # Deterministic synthetic parameters (shapes per nn.Linear in __init__).
    w_weight = jax.random.normal(k1, (U, 2 * H), jnp.float32) * 0.1   # W: (units, 2*hidden)
    w_bias = jax.random.normal(k2, (U,), jnp.float32) * 0.1
    v_weight = jax.random.normal(k3, (1, U), jnp.float32) * 0.1       # V: (1, units)
    v_bias = jax.random.normal(k4, (1,), jnp.float32) * 0.1

    query = jax.random.normal(k5, (1, B, H), jnp.float32)             # (1, B, H)
    values = jax.random.normal(k6, (B, S, H), jnp.float32)            # (B, S, H)

    ctx_exp, attn_exp = reference(query, values, w_weight, w_bias,
                                  v_weight, v_bias)

    # Strict-accuracy path (f32 compute) -- verifies exact kernel semantics.
    ctx32, attn32 = luong_attention_concat(query, values, w_weight, w_bias,
                                           v_weight, v_bias,
                                           compute_dtype=jnp.float32)
    jax.block_until_ready((ctx32, attn32))
    assert ctx32.shape == (B, H) and attn32.shape == (B, S, 1)
    assert jnp.allclose(ctx32, ctx_exp, atol=1e-5, rtol=1e-5)
    assert jnp.allclose(attn32, attn_exp, atol=1e-5, rtol=1e-5)

    # Default bf16 values/weights path (half the HBM traffic on the dominant
    # stream); softmax / attention weights / context math stays f32.
    ctx_bf, attn_bf = luong_attention_concat(query, values, w_weight, w_bias,
                                             v_weight, v_bias)
    jax.block_until_ready((ctx_bf, attn_bf))
    assert ctx_bf.shape == (B, H) and attn_bf.shape == (B, S, 1)
    assert jnp.allclose(ctx_bf, ctx_exp, atol=2e-2, rtol=2e-2)
    assert jnp.allclose(attn_bf, attn_exp, atol=2e-2, rtol=2e-2)

    print("KERNEL_OK")
</pallas_src>

<mosaic_0001>
module attributes {stable_mosaic.version = 11 : i64} {
  func.func @_luong_concat_kernel(%arg0: i32, %arg1: memref<8x16xf32, #tpu.memory_space<vmem>>, %arg2: memref<64x32xf32, #tpu.memory_space<vmem>>, %arg3: memref<32x16xf32, #tpu.memory_space<vmem>>, %arg4: memref<1x16xf32, #tpu.memory_space<vmem>>, %arg5: memref<8x32xf32, #tpu.memory_space<vmem>>, %arg6: memref<8x8xf32, #tpu.memory_space<vmem>>) attributes {dimension_semantics = [#tpu.dimension_semantics<parallel>], iteration_bounds = array<i64: 1>, scalar_prefetch = 0 : i64, scratch_operands = 0 : i64, tpu.core_type = #tpu.core_type<tc>, window_params = [{transform_indices = @transform_0, window_bounds = array<i64: 8, 16>}, {transform_indices = @transform_1, window_bounds = array<i64: 64, 32>}, {pipeline_mode = #tpu.pipeline_mode<synchronous>, transform_indices = @transform_2, window_bounds = array<i64: 32, 16>}, {pipeline_mode = #tpu.pipeline_mode<synchronous>, transform_indices = @transform_3, window_bounds = array<i64: 1, 16>}, {transform_indices = @transform_4, window_bounds = array<i64: 8, 32>}, {transform_indices = @transform_5, window_bounds = array<i64: 8, 8>}]} {
    %c0 = arith.constant 0 : index
    %c0_0 = arith.constant 0 : index
    %0 = vector.load %arg2[%c0, %c0_0] : memref<64x32xf32, #tpu.memory_space<vmem>>, vector<64x32xf32>
    %c0_1 = arith.constant 0 : index
    %c0_2 = arith.constant 0 : index
    %1 = vector.load %arg3[%c0_1, %c0_2] : memref<32x16xf32, #tpu.memory_space<vmem>>, vector<32x16xf32>
    %cst = arith.constant dense<0.000000e+00> : vector<64x16xf32>
    %2 = tpu.matmul %0, %1, %cst {dimension_numbers = #tpu.dot_dimension_numbers<[1], [0], [0], [1], [0, 0, 1, 1], [], []>} : vector<64x32xf32>, vector<32x16xf32>, vector<64x16xf32> -> vector<64x16xf32>
    %3 = vector.shape_cast %2 : vector<64x16xf32> to vector<8x8x16xf32>
    %c0_3 = arith.constant 0 : index
    %c0_4 = arith.constant 0 : index
    %4 = vector.load %arg1[%c0_3, %c0_4] : memref<8x16xf32, #tpu.memory_space<vmem>>, vector<8x16xf32>
    %5 = vector.shape_cast %4 : vector<8x16xf32> to vector<8x1x16xf32>
    %6 = vector.broadcast %5 : vector<8x1x16xf32> to vector<8x8x16xf32>
    %7 = arith.addf %3, %6 : vector<8x8x16xf32>
    %8 = math.tanh %7 : vector<8x8x16xf32>
    %c0_5 = arith.constant 0 : index
    %c0_6 = arith.constant 0 : index
    %9 = vector.load %arg4[%c0_5, %c0_6] : memref<1x16xf32, #tpu.memory_space<vmem>>, vector<1x16xf32>
    %10 = vector.shape_cast %9 : vector<1x16xf32> to vector<1x1x16xf32>
    %11 = vector.broadcast %10 : vector<1x1x16xf32> to vector<8x8x16xf32>
    %12 = arith.mulf %8, %11 : vector<8x8x16xf32>
    %cst_7 = arith.constant dense<0.000000e+00> : vector<8x8xf32>
    %13 = vector.multi_reduction <add>, %12, %cst_7 [2] : vector<8x8x16xf32> to vector<8x8xf32>
    %cst_8 = arith.constant dense<0xFF800000> : vector<8xf32>
    %14 = vector.multi_reduction <maximumf>, %13, %cst_8 [1] : vector<8x8xf32> to vector<8xf32>
    %15 = vector.shape_cast %14 : vector<8xf32> to vector<8x1xf32>
    %16 = vector.broadcast %15 : vector<8x1xf32> to vector<8x8xf32>
    %17 = arith.subf %13, %16 : vector<8x8xf32>
    %18 = math.exp %17 : vector<8x8xf32>
    %cst_9 = arith.constant dense<0.000000e+00> : vector<8xf32>
    %19 = vector.multi_reduction <add>, %18, %cst_9 [1] : vector<8x8xf32> to vector<8xf32>
    %20 = vector.shape_cast %19 : vector<8xf32> to vector<8x1xf32>
    %21 = tpu.reciprocal %20 : vector<8x1xf32> -> vector<8x1xf32>
    %22 = vector.broadcast %21 : vector<8x1xf32> to vector<8x8xf32>
    %23 = arith.mulf %18, %22 : vector<8x8xf32>
    %c0_10 = arith.constant 0 : index
    %c0_11 = arith.constant 0 : index
    %24 = vector.load %arg6[%c0_10, %c0_11] : memref<8x8xf32, #tpu.memory_space<vmem>>, vector<8x8xf32>
    tpu.vector_store %arg6[%c0_10, %c0_11], %23 {strides = array<i32>} : memref<8x8xf32, #tpu.memory_space<vmem>>, vector<8x8xf32>,
    %25 = vector.shape_cast %0 : vector<64x32xf32> to vector<8x8x32xf32>
    %26 = vector.shape_cast %23 : vector<8x8xf32> to vector<8x8x1xf32>
    %27 = vector.broadcast %26 : vector<8x8x1xf32> to vector<8x8x32xf32>
    %28 = arith.mulf %27, %25 : vector<8x8x32xf32>
    %cst_12 = arith.constant dense<0.000000e+00> : vector<8x32xf32>
    %29 = vector.multi_reduction <add>, %28, %cst_12 [1] : vector<8x8x32xf32> to vector<8x32xf32>
    %c0_13 = arith.constant 0 : index
    %c0_14 = arith.constant 0 : index
    %30 = vector.load %arg5[%c0_13, %c0_14] : memref<8x32xf32, #tpu.memory_space<vmem>>, vector<8x32xf32>
    tpu.vector_store %arg5[%c0_13, %c0_14], %29 {strides = array<i32>} : memref<8x32xf32, #tpu.memory_space<vmem>>, vector<8x32xf32>,
    return
  }
  func.func @transform_0(%arg0: i32) -> (i32, i32) {
    %c0_i32 = arith.constant 0 : i32
    %c0_i32_0 = arith.constant 0 : i32
    return %arg0, %c0_i32 : i32, i32
  }
  func.func @transform_1(%arg0: i32) -> (i32, i32) {
    %c0_i32 = arith.constant 0 : i32
    %c0_i32_0 = arith.constant 0 : i32
    return %arg0, %c0_i32 : i32, i32
  }
  func.func @transform_2(%arg0: i32) -> (i32, i32) {
    %c0_i32 = arith.constant 0 : i32
    %c0_i32_0 = arith.constant 0 : i32
    %c0_i32_1 = arith.constant 0 : i32
    return %c0_i32, %c0_i32_0 : i32, i32
  }
  func.func @transform_3(%arg0: i32) -> (i32, i32) {
    %c0_i32 = arith.constant 0 : i32
    %c0_i32_0 = arith.constant 0 : i32
    %c0_i32_1 = arith.constant 0 : i32
    return %c0_i32, %c0_i32_0 : i32, i32
  }
  func.func @transform_4(%arg0: i32) -> (i32, i32) {
    %c0_i32 = arith.constant 0 : i32
    %c0_i32_0 = arith.constant 0 : i32
    return %arg0, %c0_i32 : i32, i32
  }
  func.func @transform_5(%arg0: i32) -> (i32, i32) {
    %c0_i32 = arith.constant 0 : i32
    %c0_i32_0 = arith.constant 0 : i32
    return %arg0, %c0_i32 : i32, i32
  }
}

</mosaic_0001>

<llo_original>
// kernel: tpu_custom_call.1
$region0: #{tpu_custom_call.1}
  #allocation0 [shape = 'u32[]', space=smem, size = 0x4, offset = 0x4, fixed_abs, tag = 'smem constant byte address 0x4 - core index']
  #allocation1 [shape = 'u32[144,128]{1,0:T(1,128)}', space=vmem, size = 0x12000, scoped, tag = 'internal scratch']
  %s0 = inlined_call_operand.vmem [shape: f32[8,16], index: 0, kind: input, shape index: {}]
  %s1 = inlined_call_operand.vmem [shape: f32[64,32], index: 1, kind: input, shape index: {}]
  %s2 = inlined_call_operand.vmem [shape: f32[32,16], index: 2, kind: input, shape index: {}]
  %s3 = inlined_call_operand.vmem [shape: f32[1,16], index: 3, kind: input, shape index: {}]
  %s4 = inlined_call_operand.hbm [shape: f32[8,32], index: 4, kind: output, shape index: {0}]
  %s5 = inlined_call_operand.hbm [shape: f32[8,8], index: 5, kind: output, shape index: {1}]
  %6 = xla_tuple %s4, %s5
  %s7 = sld [smem:[#allocation0]]
  $region34: #{tpu_custom_call.1} parent=0
    _
  %s9 = ssub.s32 1, %s7
  %s10 = scalar_select 0, %s9, %s7
  $region1: #{tpu_custom_call.1} parent=0
    #allocation2 [shape = 'u8[4096]{0}', space=vmem, size = 0x1000, scoped, tag = 'output window, operand 0, single buffered']
    #allocation3 [shape = 's32[1]{0}', space=sflag, size = 0x4, scoped, tag = 'scoped memory for tpu_custom_call.1']
    #allocation4 [shape = 'u8[4096]{0}', space=vmem, size = 0x1000, scoped, tag = 'output window, operand 1, single buffered']
    #allocation5 [shape = 's32[1]{0}', space=sflag, size = 0x4, scoped, tag = 'scoped memory for tpu_custom_call.1']
    %11 = vsyncpa [#allocation3], 0
    %12 = vsyncpa [#allocation5], 0
    // Predicated region
    $region2: #{tpu_custom_call.1} parent=1 // pred_check
      _
    $region3: #{tpu_custom_call.1} parent=1 // pred_check_branch
      %14 = sbr.rel (0) target = $region5
    $region4: #{tpu_custom_call.1} parent=1 // pred_region
      _
    $region5: #{tpu_custom_call.1} parent=1 // pred_fallthru
      _
    // Predicated region
    $region6: #{tpu_custom_call.1} parent=1 // pred_check
      _
    $region7: #{tpu_custom_call.1} parent=1 // pred_check_branch
      %16 = sbr.rel (0) target = $region9
    $region8: #{tpu_custom_call.1} parent=1 // pred_region
      _
    $region9: #{tpu_custom_call.1} parent=1 // pred_fallthru
      _
    // Predicated region
    $region10: #{tpu_custom_call.1} parent=1 // pred_check
      _
    $region11: #{tpu_custom_call.1} parent=1 // pred_check_branch
      %18 = sbr.rel (0) target = $region13
    $region12: #{tpu_custom_call.1} parent=1 // pred_region
      _
    $region13: #{tpu_custom_call.1} parent=1 // pred_fallthru
      _
    // Predicated region
    $region14: #{tpu_custom_call.1} parent=1 // pred_check
      _
    $region15: #{tpu_custom_call.1} parent=1 // pred_check_branch
      %20 = sbr.rel (0) target = $region17
    $region16: #{tpu_custom_call.1} parent=1 // pred_region
      _
    $region17: #{tpu_custom_call.1} parent=1 // pred_fallthru
      _
    %v21 = vld [vmem:[%s1] sm:$0xff]
    %v22 = vld [vmem:[%s1 + $0x8] sm:$0xff]
    %v23 = vld [vmem:[%s1 + $0x10] sm:$0xff]
    %v24 = vld [vmem:[%s1 + $0x18] sm:$0xff]
    %v25 = vld [vmem:[%s1 + $0x20] sm:$0xff]
    %v26 = vld [vmem:[%s1 + $0x28] sm:$0xff]
    %v27 = vld [vmem:[%s1 + $0x30] sm:$0xff]
    %v28 = vld [vmem:[%s1 + $0x38] sm:$0xff]
    %v29 = vld [vmem:[%s2] sm:$0xff]
    %v30 = vld [vmem:[%s2 + $0x8] sm:$0xff]
    %v31 = vld [vmem:[%s2 + $0x10] sm:$0xff]
    %v32 = vld [vmem:[%s2 + $0x18] sm:$0xff]
    %vm33 = vcmask 261120
    %v35 = vsel %vm33, %v21, 0
    %v38 = vsel %vm33, %v22, 0
    %v41 = vsel %vm33, %v23, 0
    %v44 = vsel %vm33, %v24, 0
    %v47 = vsel %vm33, %v25, 0
    %v50 = vsel %vm33, %v26, 0
    %v53 = vsel %vm33, %v27, 0
    %v56 = vsel %vm33, %v28, 0
    %58 = vmatprep.subr.mxu0 0.0
    %59 = vmatpush1.msra.mxu0 0.0
    %60 = vmatprep.subr.mxu0 0.0
    %61 = vmatpush1.msra.mxu0 0.0
    %62 = vmatprep.subr.mxu0 0.0
    %63 = vmatpush1.msra.mxu0 0.0
    %64 = vmatprep.subr.mxu0 0.0
    %65 = vmatpush1.msra.mxu0 0.0
    %66 = vmatprep.subr.mxu0 0.0
    %67 = vmatpush1.msra.mxu0 0.0
    %68 = vmatprep.subr.mxu0 0.0
    %69 = vmatpush1.msra.mxu0 0.0
    %70 = vmatprep.subr.mxu0 0.0
    %71 = vmatpush1.msra.mxu0 0.0
    %72 = vmatprep.subr.mxu0 0.0
    %73 = vmatpush1.msra.mxu0 0.0
    %74 = vmatprep.subr.mxu0 0.0
    %75 = vmatpush1.msra.mxu0 0.0
    %76 = vmatprep.subr.mxu0 0.0
    %77 = vmatpush1.msra.mxu0 0.0
    %78 = vmatprep.subr.mxu0 0.0
    %79 = vmatpush1.msra.mxu0 0.0
    %80 = vmatprep.subr.mxu0 0.0
    %81 = vmatpush1.msra.mxu0 0.0
    %82 = vmatprep.subr.mxu0 0.0
    %83 = vmatpush1.msra.mxu0 %v32
    %84 = vmatprep.subr.mxu0 0.0
    %85 = vmatpush1.msra.mxu0 %v31
    %86 = vmatprep.subr.mxu0 0.0
    %87 = vmatpush1.msra.mxu0 %v30
    %88 = vmatprep.subr.mxu0 0.0
    %89 = vmatpush1.msra.mxu0 %v29
    %90 = vmatprep.subr.mxu0 0.0
    %91 = vmatpush2.msra.mxu0 0.0
    %92 = vmatprep.subr.mxu0 0.0
    %93 = vmatpush2.msra.mxu0 0.0
    %94 = vmatprep.subr.mxu0 0.0
    %95 = vmatpush2.msra.mxu0 0.0
    %96 = vmatprep.subr.mxu0 0.0
    %97 = vmatpush2.msra.mxu0 0.0
    %98 = vmatprep.subr.mxu0 0.0
    %99 = vmatpush2.msra.mxu0 0.0
    %100 = vmatprep.subr.mxu0 0.0
    %101 = vmatpush2.msra.mxu0 0.0
    %102 = vmatprep.subr.mxu0 0.0
    %103 = vmatpush2.msra.mxu0 0.0
    %104 = vmatprep.subr.mxu0 0.0
    %105 = vmatpush2.msra.mxu0 0.0
    %106 = vmatprep.subr.mxu0 0.0
    %107 = vmatpush2.msra.mxu0 0.0
    %108 = vmatprep.subr.mxu0 0.0
    %109 = vmatpush2.msra.mxu0 0.0
    %110 = vmatprep.subr.mxu0 0.0
    %111 = vmatpush2.msra.mxu0 0.0
    %112 = vmatprep.subr.mxu0 0.0
    %113 = vmatpush2.msra.mxu0 0.0
    %114 = vmatprep.subr.mxu0 0.0
    %115 = vmatpush2.msra.mxu0 0.0
    %116 = vmatprep.subr.mxu0 0.0
    %117 = vmatpush2.msra.mxu0 0.0
    %118 = vmatprep.subr.mxu0 0.0
    %119 = vmatpush2.msra.mxu0 0.0
    %120 = vmatprep.subr.mxu0 0.0
    %121 = vmatpush2.msra.mxu0 0.0
    %122 = vmatprep.mubr.f32.mxu0 0.0
    %123 = vmatmul.mubr.f32.gmra.mxu0 %v35
    %v124 = vpop.f32.mrf.mxu0
    %v125 = vadd.f32 0.0, %v124
    %v126 = vpop.f32.mrf.mxu0
    %127 = vmatprep.mubr.f32.mxu0 0.0
    %128 = vmatmul.mubr.f32.gmra.mxu0 %v38
    %v129 = vpop.f32.mrf.mxu0
    %v130 = vadd.f32 0.0, %v129
    %v131 = vpop.f32.mrf.mxu0
    %132 = vmatprep.mubr.f32.mxu0 0.0
    %133 = vmatmul.mubr.f32.gmra.mxu0 %v41
    %v134 = vpop.f32.mrf.mxu0
    %v135 = vadd.f32 0.0, %v134
    %v136 = vpop.f32.mrf.mxu0
    %137 = vmatprep.mubr.f32.mxu0 0.0
    %138 = vmatmul.mubr.f32.gmra.mxu0 %v44
    %v139 = vpop.f32.mrf.mxu0
    %v140 = vadd.f32 0.0, %v139
    %v141 = vpop.f32.mrf.mxu0
    %142 = vmatprep.mubr.f32.mxu0 0.0
    %143 = vmatmul.mubr.f32.gmra.mxu0 %v47
    %v144 = vpop.f32.mrf.mxu0
    %v145 = vadd.f32 0.0, %v144
    %v146 = vpop.f32.mrf.mxu0
    %147 = vmatprep.mubr.f32.mxu0 0.0
    %148 = vmatmul.mubr.f32.gmra.mxu0 %v50
    %v149 = vpop.f32.mrf.mxu0
    %v150 = vadd.f32 0.0, %v149
    %v151 = vpop.f32.mrf.mxu0
    %152 = vmatprep.mubr.f32.mxu0 0.0
    %153 = vmatmul.mubr.f32.gmra.mxu0 %v53
    %v154 = vpop.f32.mrf.mxu0
    %v155 = vadd.f32 0.0, %v154
    %v156 = vpop.f32.mrf.mxu0
    %157 = vmatprep.mubr.f32.mxu0 0.0
    %158 = vmatmul.mubr.f32.gmra.mxu0 %v56
    %v159 = vpop.f32.mrf.mxu0
    %v160 = vadd.f32 0.0, %v159
    %v161 = vpop.f32.mrf.mxu0
    %162 = vdwg.mxu0
    %v163 = vld [vmem:[%s0] sm:$0xff]
    %v165 = vcombine.high %v163, %v163
    %v167 = vunpack.c.l.s4 1966171168
    %v168 = vunpack.c.0.s8 %v167
    %v169 = vlaneseq
    %v170 = vshrl.u32 %v169, 7
    %v171 = vsub.s32 %v168, %v170
    %v172 = vrot.slane %v163, %v171
    %v174 = vunpack.c.l.s4 1966171168
    %v175 = vunpack.c.0.s8 %v174
    %v176 = vlaneseq
    %v177 = vshrl.u32 %v176, 7
    %v178 = vsub.s32 %v175, %v177
    %v179 = vrot.slane %v165, %v178
    %v180 = vcombine.high %v172, %v172
    %v181 = vcombine.high %v179, %v179
    %v183 = vunpack.c.l.s4 1966171168
    %v184 = vunpack.c.0.s8 %v183
    %v185 = vlaneseq
    %v186 = vshrl.u32 %v185, 7
    %v187 = vsub.s32 %v184, %v186
    %v188 = vrot.slane %v172, %v187
    %v190 = vunpack.c.l.s4 1966171168
    %v191 = vunpack.c.0.s8 %v190
    %v192 = vlaneseq
    %v193 = vshrl.u32 %v192, 7
    %v194 = vsub.s32 %v191, %v193
    %v195 = vrot.slane %v179, %v194
    %v197 = vunpack.c.l.s4 1966171168
    %v198 = vunpack.c.0.s8 %v197
    %v199 = vlaneseq
    %v200 = vshrl.u32 %v199, 7
    %v201 = vsub.s32 %v198, %v200
    %v202 = vrot.slane %v180, %v201
    %v204 = vunpack.c.l.s4 1966171168
    %v205 = vunpack.c.0.s8 %v204
    %v206 = vlaneseq
    %v207 = vshrl.u32 %v206, 7
    %v208 = vsub.s32 %v205, %v207
    %v209 = vrot.slane %v181, %v208
    %v210 = vcombine.high %v188, %v188
    %v211 = vcombine.high %v195, %v195
    %v212 = vcombine.high %v202, %v202
    %v213 = vcombine.high %v209, %v209
    %v214 = vlaneseq
    %v215 = vshrl.u32 %v214, 7
    %v216 = vsub.s32 0, %v215
    %v217 = vrot.slane %v188, %v216
    %v218 = vlaneseq
    %v219 = vshrl.u32 %v218, 7
    %v220 = vsub.s32 0, %v219
    %v221 = vrot.slane %v202, %v220
    %v222 = vlaneseq
    %v223 = vshrl.u32 %v222, 7
    %v224 = vsub.s32 0, %v223
    %v225 = vrot.slane %v210, %v224
    %v226 = vlaneseq
    %v227 = vshrl.u32 %v226, 7
    %v228 = vsub.s32 0, %v227
    %v229 = vrot.slane %v212, %v228
    %v230 = vlaneseq
    %v231 = vshrl.u32 %v230, 7
    %v232 = vsub.s32 0, %v231
    %v233 = vrot.slane %v195, %v232
    %v234 = vlaneseq
    %v235 = vshrl.u32 %v234, 7
    %v236 = vsub.s32 0, %v235
    %v237 = vrot.slane %v209, %v236
    %v238 = vlaneseq
    %v239 = vshrl.u32 %v238, 7
    %v240 = vsub.s32 0, %v239
    %v241 = vrot.slane %v211, %v240
    %v242 = vlaneseq
    %v243 = vshrl.u32 %v242, 7
    %v244 = vsub.s32 0, %v243
    %v245 = vrot.slane %v213, %v244
    %v254 = vadd.f32 %v125, %v217
    %v255 = vadd.f32 %v130, %v221
    %v256 = vadd.f32 %v135, %v225
    %v257 = vadd.f32 %v140, %v229
    %v258 = vadd.f32 %v145, %v233
    %v259 = vadd.f32 %v150, %v237
    %v260 = vadd.f32 %v155, %v241
    %v261 = vadd.f32 %v160, %v245
    %v262 = vtanh.pop %v254
    %v263 = vtanh.pop %v255
    %v264 = vtanh.pop %v256
    %v265 = vtanh.pop %v257
    %v266 = vtanh.pop %v258
    %v267 = vtanh.pop %v259
    %v268 = vtanh.pop %v260
    %v269 = vtanh.pop %v261
    %v270 = vld [vmem:[%s3] sm:$0x1]
    %v272 = vlaneseq
    %v273 = vshrl.u32 %v272, 7
    %v274 = vsub.s32 0, %v273
    %v275 = vrot.slane %v270, %v274
    %v277 = vmul.f32 %v262, %v275
    %v278 = vmul.f32 %v263, %v275
    %v279 = vmul.f32 %v264, %v275
    %v280 = vmul.f32 %v265, %v275
    %v281 = vmul.f32 %v266, %v275
    %v282 = vmul.f32 %v267, %v275
    %v283 = vmul.f32 %v268, %v275
    %v284 = vmul.f32 %v269, %v275
    %vm285 = vcmask 130048
    %v286 = vsel %vm285, %v277, 0.0
    %287 = vadd.xlane.f32.xlu0 %v286
    %v288 = vpop.xlane.xlu0 %287
    %v289 = vsel %vm285, %v278, 0.0
    %290 = vadd.xlane.f32.xlu0 %v289
    %v291 = vpop.xlane.xlu0 %290
    %v292 = vsel %vm285, %v279, 0.0
    %293 = vadd.xlane.f32.xlu0 %v292
    %v294 = vpop.xlane.xlu0 %293
    %v295 = vsel %vm285, %v280, 0.0
    %296 = vadd.xlane.f32.xlu0 %v295
    %v297 = vpop.xlane.xlu0 %296
    %v298 = vsel %vm285, %v281, 0.0
    %299 = vadd.xlane.f32.xlu0 %v298
    %v300 = vpop.xlane.xlu0 %299
    %v301 = vsel %vm285, %v282, 0.0
    %302 = vadd.xlane.f32.xlu0 %v301
    %v303 = vpop.xlane.xlu0 %302
    %v304 = vsel %vm285, %v283, 0.0
    %305 = vadd.xlane.f32.xlu0 %v304
    %v306 = vpop.xlane.xlu0 %305
    %v307 = vsel %vm285, %v284, 0.0
    %308 = vadd.xlane.f32.xlu0 %v307
    %v309 = vpop.xlane.xlu0 %308
    %v318 = vlaneseq
    %v319 = vand.u32 %v318, 127
    %v320 = vlaneseq
    %v321 = vshrl.u32 %v320, 7
    %v322 = vsub.s32 %v319, %v321
    %v323 = vrot.slane %v288, %v322
    %v324 = vlaneseq
    %v325 = vshrl.u32 %v324, 7
    %v326 = vsub.s32 %v319, %v325
    %v327 = vrot.slane %v291, %v326
    %v328 = vlaneseq
    %v329 = vshrl.u32 %v328, 7
    %v330 = vsub.s32 %v319, %v329
    %v331 = vrot.slane %v294, %v330
    %v332 = vlaneseq
    %v333 = vshrl.u32 %v332, 7
    %v334 = vsub.s32 %v319, %v333
    %v335 = vrot.slane %v297, %v334
    %v336 = vlaneseq
    %v337 = vshrl.u32 %v336, 7
    %v338 = vsub.s32 %v319, %v337
    %v339 = vrot.slane %v300, %v338
    %v340 = vlaneseq
    %v341 = vshrl.u32 %v340, 7
    %v342 = vsub.s32 %v319, %v341
    %v343 = vrot.slane %v303, %v342
    %v344 = vlaneseq
    %v345 = vshrl.u32 %v344, 7
    %v346 = vsub.s32 %v319, %v345
    %v347 = vrot.slane %v306, %v346
    %v348 = vlaneseq
    %v349 = vshrl.u32 %v348, 7
    %v350 = vsub.s32 %v319, %v349
    %v351 = vrot.slane %v309, %v350
    %vm352 = vcmask 1041409
    %v353 = vsel %vm352, %v327, %v323
    %vm354 = vcmask 1042434
    %v355 = vsel %vm354, %v331, %v353
    %vm356 = vcmask 1043459
    %v357 = vsel %vm356, %v335, %v355
    %vm358 = vcmask 1044484
    %v359 = vsel %vm358, %v339, %v357
    %vm360 = vcmask 1045509
    %v361 = vsel %vm360, %v343, %v359
    %vm362 = vcmask 1046534
    %v363 = vsel %vm362, %v347, %v361
    %vm364 = vcmask 1047559
    %v365 = vsel %vm364, %v351, %v363
    %vm367 = vcmask 64512
    %v368 = vsel %vm367, %v365, -inf
    %369 = vmax.xlane.f32.xlu0 %v368
    %v370 = vpop.xlane.xlu0 %369
    %v372 = vlaneseq
    %v373 = vshrl.u32 %v372, 7
    %v374 = vsub.s32 0, %v373
    %v375 = vrot.slane %v370, %v374
    %v376 = vlaneseq
    %v377 = vshrl.u32 %v376, 7
    %v378 = vsub.s32 1, %v377
    %v379 = vrot.slane %v370, %v378
    %v380 = vlaneseq
    %v381 = vshrl.u32 %v380, 7
    %v382 = vsub.s32 2, %v381
    %v383 = vrot.slane %v370, %v382
    %v384 = vlaneseq
    %v385 = vshrl.u32 %v384, 7
    %v386 = vsub.s32 3, %v385
    %v387 = vrot.slane %v370, %v386
    %v388 = vlaneseq
    %v389 = vshrl.u32 %v388, 7
    %v390 = vsub.s32 4, %v389
    %v391 = vrot.slane %v370, %v390
    %v392 = vlaneseq
    %v393 = vshrl.u32 %v392, 7
    %v394 = vsub.s32 5, %v393
    %v395 = vrot.slane %v370, %v394
    %v396 = vlaneseq
    %v397 = vshrl.u32 %v396, 7
    %v398 = vsub.s32 6, %v397
    %v399 = vrot.slane %v370, %v398
    %v400 = vlaneseq
    %v401 = vshrl.u32 %v400, 7
    %v402 = vsub.s32 7, %v401
    %v403 = vrot.slane %v370, %v402
    %v412 = vsub.f32 %v288, %v375
    %v413 = vsub.f32 %v291, %v379
    %v414 = vsub.f32 %v294, %v383
    %v415 = vsub.f32 %v297, %v387
    %v416 = vsub.f32 %v300, %v391
    %v417 = vsub.f32 %v303, %v395
    %v418 = vsub.f32 %v306, %v399
    %v419 = vsub.f32 %v309, %v403
    %v420 = vmul.f32 %v412, 1.442695
    %v421 = vpow.pop %v420
    %v422 = vmul.f32 %v413, 1.442695
    %v423 = vpow.pop %v422
    %v424 = vmul.f32 %v414, 1.442695
    %v425 = vpow.pop %v424
    %v426 = vmul.f32 %v415, 1.442695
    %v427 = vpow.pop %v426
    %v428 = vmul.f32 %v416, 1.442695
    %v429 = vpow.pop %v428
    %v430 = vmul.f32 %v417, 1.442695
    %v431 = vpow.pop %v430
    %v432 = vmul.f32 %v418, 1.442695
    %v433 = vpow.pop %v432
    %v434 = vmul.f32 %v419, 1.442695
    %v435 = vpow.pop %v434
    %444 = vset.pattern.permute.xlu0 0
    %445 = vperm.xlu0 %444, %v421
    %v446 = vpop.permute.xlu0 %445
    %447 = vset.pattern.permute.xlu0 0
    %448 = vperm.xlu0 %447, %v423
    %v449 = vpop.permute.xlu0 %448
    %450 = vset.pattern.permute.xlu0 0
    %451 = vperm.xlu0 %450, %v425
    %v452 = vpop.permute.xlu0 %451
    %453 = vset.pattern.permute.xlu0 0
    %454 = vperm.xlu0 %453, %v427
    %v455 = vpop.permute.xlu0 %454
    %456 = vset.pattern.permute.xlu0 0
    %457 = vperm.xlu0 %456, %v429
    %v458 = vpop.permute.xlu0 %457
    %459 = vset.pattern.permute.xlu0 0
    %460 = vperm.xlu0 %459, %v431
    %v461 = vpop.permute.xlu0 %460
    %462 = vset.pattern.permute.xlu0 0
    %463 = vperm.xlu0 %462, %v433
    %v464 = vpop.permute.xlu0 %463
    %465 = vset.pattern.permute.xlu0 0
    %466 = vperm.xlu0 %465, %v435
    %v467 = vpop.permute.xlu0 %466
    %v468 = vlaneseq
    %v469 = vshrl.u32 %v468, 7
    %v470 = vsub.s32 %v319, %v469
    %v471 = vrot.slane %v446, %v470
    %v472 = vlaneseq
    %v473 = vshrl.u32 %v472, 7
    %v474 = vsub.s32 %v319, %v473
    %v475 = vrot.slane %v449, %v474
    %v476 = vlaneseq
    %v477 = vshrl.u32 %v476, 7
    %v478 = vsub.s32 %v319, %v477
    %v479 = vrot.slane %v452, %v478
    %v480 = vlaneseq
    %v481 = vshrl.u32 %v480, 7
    %v482 = vsub.s32 %v319, %v481
    %v483 = vrot.slane %v455, %v482
    %v484 = vlaneseq
    %v485 = vshrl.u32 %v484, 7
    %v486 = vsub.s32 %v319, %v485
    %v487 = vrot.slane %v458, %v486
    %v488 = vlaneseq
    %v489 = vshrl.u32 %v488, 7
    %v490 = vsub.s32 %v319, %v489
    %v491 = vrot.slane %v461, %v490
    %v492 = vlaneseq
    %v493 = vshrl.u32 %v492, 7
    %v494 = vsub.s32 %v319, %v493
    %v495 = vrot.slane %v464, %v494
    %v496 = vlaneseq
    %v497 = vshrl.u32 %v496, 7
    %v498 = vsub.s32 %v319, %v497
    %v499 = vrot.slane %v467, %v498
    %v500 = vsel %vm352, %v475, %v471
    %v501 = vsel %vm354, %v479, %v500
    %v502 = vsel %vm356, %v483, %v501
    %v503 = vsel %vm358, %v487, %v502
    %v504 = vsel %vm360, %v491, %v503
    %v505 = vsel %vm362, %v495, %v504
    %v506 = vsel %vm364, %v499, %v505
    %v508 = vsel %vm367, %v506, 0.0
    %509 = vadd.xlane.f32.xlu0 %v508
    %v510 = vpop.xlane.xlu0 %509
    %v511 = vrcp.pop %v510
    %v513 = vlaneseq
    %v514 = vshrl.u32 %v513, 7
    %v515 = vsub.s32 0, %v514
    %v516 = vrot.slane %v511, %v515
    %v517 = vlaneseq
    %v518 = vshrl.u32 %v517, 7
    %v519 = vsub.s32 1, %v518
    %v520 = vrot.slane %v511, %v519
    %v521 = vlaneseq
    %v522 = vshrl.u32 %v521, 7
    %v523 = vsub.s32 2, %v522
    %v524 = vrot.slane %v511, %v523
    %v525 = vlaneseq
    %v526 = vshrl.u32 %v525, 7
    %v527 = vsub.s32 3, %v526
    %v528 = vrot.slane %v511, %v527
    %v529 = vlaneseq
    %v530 = vshrl.u32 %v529, 7
    %v531 = vsub.s32 4, %v530
    %v532 = vrot.slane %v511, %v531
    %v533 = vlaneseq
    %v534 = vshrl.u32 %v533, 7
    %v535 = vsub.s32 5, %v534
    %v536 = vrot.slane %v511, %v535
    %v537 = vlaneseq
    %v538 = vshrl.u32 %v537, 7
    %v539 = vsub.s32 6, %v538
    %v540 = vrot.slane %v511, %v539
    %v541 = vlaneseq
    %v542 = vshrl.u32 %v541, 7
    %v543 = vsub.s32 7, %v542
    %v544 = vrot.slane %v511, %v543
    %v553 = vmul.f32 %v421, %v516
    %v554 = vmul.f32 %v423, %v520
    %v555 = vmul.f32 %v425, %v524
    %v556 = vmul.f32 %v427, %v528
    %v557 = vmul.f32 %v429, %v532
    %v558 = vmul.f32 %v431, %v536
    %v559 = vmul.f32 %v433, %v540
    %v560 = vmul.f32 %v435, %v544
    %569 = vset.pattern.permute.xlu0 0
    %570 = vperm.xlu0 %569, %v553
    %v571 = vpop.permute.xlu0 %570
    %572 = vset.pattern.permute.xlu0 0
    %573 = vperm.xlu0 %572, %v554
    %v574 = vpop.permute.xlu0 %573
    %575 = vset.pattern.permute.xlu0 0
    %576 = vperm.xlu0 %575, %v555
    %v577 = vpop.permute.xlu0 %576
    %578 = vset.pattern.permute.xlu0 0
    %579 = vperm.xlu0 %578, %v556
    %v580 = vpop.permute.xlu0 %579
    %581 = vset.pattern.permute.xlu0 0
    %582 = vperm.xlu0 %581, %v557
    %v583 = vpop.permute.xlu0 %582
    %584 = vset.pattern.permute.xlu0 0
    %585 = vperm.xlu0 %584, %v558
    %v586 = vpop.permute.xlu0 %585
    %587 = vset.pattern.permute.xlu0 0
    %588 = vperm.xlu0 %587, %v559
    %v589 = vpop.permute.xlu0 %588
    %590 = vset.pattern.permute.xlu0 0
    %591 = vperm.xlu0 %590, %v560
    %v592 = vpop.permute.xlu0 %591
    %v593 = vlaneseq
    %v594 = vshrl.u32 %v593, 7
    %v595 = vsub.s32 %v319, %v594
    %v596 = vrot.slane %v571, %v595
    %v597 = vlaneseq
    %v598 = vshrl.u32 %v597, 7
    %v599 = vsub.s32 %v319, %v598
    %v600 = vrot.slane %v574, %v599
    %v601 = vlaneseq
    %v602 = vshrl.u32 %v601, 7
    %v603 = vsub.s32 %v319, %v602
    %v604 = vrot.slane %v577, %v603
    %v605 = vlaneseq
    %v606 = vshrl.u32 %v605, 7
    %v607 = vsub.s32 %v319, %v606
    %v608 = vrot.slane %v580, %v607
    %v609 = vlaneseq
    %v610 = vshrl.u32 %v609, 7
    %v611 = vsub.s32 %v319, %v610
    %v612 = vrot.slane %v583, %v611
    %v613 = vlaneseq
    %v614 = vshrl.u32 %v613, 7
    %v615 = vsub.s32 %v319, %v614
    %v616 = vrot.slane %v586, %v615
    %v617 = vlaneseq
    %v618 = vshrl.u32 %v617, 7
    %v619 = vsub.s32 %v319, %v618
    %v620 = vrot.slane %v589, %v619
    %v621 = vlaneseq
    %v622 = vshrl.u32 %v621, 7
    %v623 = vsub.s32 %v319, %v622
    %v624 = vrot.slane %v592, %v623
    %v625 = vsel %vm352, %v600, %v596
    %v626 = vsel %vm354, %v604, %v625
    %v627 = vsel %vm356, %v608, %v626
    %v628 = vsel %vm358, %v612, %v627
    %v629 = vsel %vm360, %v616, %v628
    %v630 = vsel %vm362, %v620, %v629
    %v631 = vsel %vm364, %v624, %v630
    %633 = vst.msk [vmem:[#allocation4] sm:$0xff] %vm367, %v631
    %v642 = vmul.f32 %v571, %v21
    %v643 = vmul.f32 %v574, %v22
    %v644 = vmul.f32 %v577, %v23
    %v645 = vmul.f32 %v580, %v24
    %v646 = vmul.f32 %v583, %v25
    %v647 = vmul.f32 %v586, %v26
    %v648 = vmul.f32 %v589, %v27
    %v649 = vmul.f32 %v592, %v28
    %v650 = vsel %vm33, %v642, 0.0
    %v651 = vrot.slane %v650, 4
    %v652 = vadd.f32 %v650, %v651
    %v653 = vrot.slane %v652, 2
    %v654 = vadd.f32 %v652, %v653
    %v655 = vrot.slane %v654, 1
    %v656 = vadd.f32 %v654, %v655
    %v657 = vsel %vm33, %v643, 0.0
    %v658 = vrot.slane %v657, 4
    %v659 = vadd.f32 %v657, %v658
    %v660 = vrot.slane %v659, 2
    %v661 = vadd.f32 %v659, %v660
    %v662 = vrot.slane %v661, 1
    %v663 = vadd.f32 %v661, %v662
    %v664 = vsel %vm33, %v644, 0.0
    %v665 = vrot.slane %v664, 4
    %v666 = vadd.f32 %v664, %v665
    %v667 = vrot.slane %v666, 2
    %v668 = vadd.f32 %v666, %v667
    %v669 = vrot.slane %v668, 1
    %v670 = vadd.f32 %v668, %v669
    %v671 = vsel %vm33, %v645, 0.0
    %v672 = vrot.slane %v671, 4
    %v673 = vadd.f32 %v671, %v672
    %v674 = vrot.slane %v673, 2
    %v675 = vadd.f32 %v673, %v674
    %v676 = vrot.slane %v675, 1
    %v677 = vadd.f32 %v675, %v676
    %v678 = vsel %vm33, %v646, 0.0
    %v679 = vrot.slane %v678, 4
    %v680 = vadd.f32 %v678, %v679
    %v681 = vrot.slane %v680, 2
    %v682 = vadd.f32 %v680, %v681
    %v683 = vrot.slane %v682, 1
    %v684 = vadd.f32 %v682, %v683
    %v685 = vsel %vm33, %v647, 0.0
    %v686 = vrot.slane %v685, 4
    %v687 = vadd.f32 %v685, %v686
    %v688 = vrot.slane %v687, 2
    %v689 = vadd.f32 %v687, %v688
    %v690 = vrot.slane %v689, 1
    %v691 = vadd.f32 %v689, %v690
    %v692 = vsel %vm33, %v648, 0.0
    %v693 = vrot.slane %v692, 4
    %v694 = vadd.f32 %v692, %v693
    %v695 = vrot.slane %v694, 2
    %v696 = vadd.f32 %v694, %v695
    %v697 = vrot.slane %v696, 1
    %v698 = vadd.f32 %v696, %v697
    %v699 = vsel %vm33, %v649, 0.0
    %v700 = vrot.slane %v699, 4
    %v701 = vadd.f32 %v699, %v700
    %v702 = vrot.slane %v701, 2
    %v703 = vadd.f32 %v701, %v702
    %v704 = vrot.slane %v703, 1
    %v705 = vadd.f32 %v703, %v704
    %v714 = vsel %vm352, %v663, %v656
    %v715 = vsel %vm354, %v670, %v714
    %v716 = vsel %vm356, %v677, %v715
    %v717 = vsel %vm358, %v684, %v716
    %v718 = vsel %vm360, %v691, %v717
    %v719 = vsel %vm362, %v698, %v718
    %v720 = vsel %vm364, %v705, %v719
    %722 = vst.msk [vmem:[#allocation2] sm:$0xff] %vm33, %v720
    // Predicated region
    $region18: #{tpu_custom_call.1} parent=1 // pred_check
      _
    $region19: #{tpu_custom_call.1} parent=1 // pred_check_branch
      %724 = sbr.rel (0) target = $region21
    $region20: #{tpu_custom_call.1} parent=1 // pred_region
      %s726 = ssub.s32 128, 128
      %727 = vsyncadd [#allocation3], %s726
      %s729 = sshll.u32 [#allocation2], 4
      %s730 = int_to_ptr.vmem [resolvable:$true] %s729
      %732 = dma.vmem_to_hbm [thread:$0]  %s730, 128, %s4, [#allocation3]
    $region21: #{tpu_custom_call.1} parent=1 // pred_fallthru
      _
    // Predicated region
    $region22: #{tpu_custom_call.1} parent=1 // pred_check
      _
    $region23: #{tpu_custom_call.1} parent=1 // pred_check_branch
      %734 = sbr.rel (0) target = $region25
    $region24: #{tpu_custom_call.1} parent=1 // pred_region
      %s736 = ssub.s32 128, 128
      %737 = vsyncadd [#allocation5], %s736
      %s739 = sshll.u32 [#allocation4], 4
      %s740 = int_to_ptr.vmem [resolvable:$true] %s739
      %742 = dma.vmem_to_hbm [thread:$0]  %s740, 128, %s5, [#allocation5]
    $region25: #{tpu_custom_call.1} parent=1 // pred_fallthru
      _
    // Predicated region
    $region26: #{tpu_custom_call.1} parent=1 // pred_check
      _
    $region27: #{tpu_custom_call.1} parent=1 // pred_check_branch
      %744 = sbr.rel (0) target = $region29
    $region28: #{tpu_custom_call.1} parent=1 // pred_region
      %745 = dma.done [#allocation3], 128
    $region29: #{tpu_custom_call.1} parent=1 // pred_fallthru
      _
    // Predicated region
    $region30: #{tpu_custom_call.1} parent=1 // pred_check
      _
    $region31: #{tpu_custom_call.1} parent=1 // pred_check_branch
      %747 = sbr.rel (0) target = $region33
    $region32: #{tpu_custom_call.1} parent=1 // pred_region
      %748 = dma.done [#allocation5], 128
    $region33: #{tpu_custom_call.1} parent=1 // pred_fallthru
      _
    %749 = vsyncpa [#allocation3], 1
    %750 = vsyncpa [#allocation5], 1

</llo_original>
